<compile_context>
chip_gen: v5e
topology: v5e:2x2
jax: 0.10.0
libtpu: 0.0.40
codegen_flags: <defaults>
</compile_context>

<pallas_src>
import jax
import jax.numpy as jnp
from jax.experimental import pallas as pl
from jax.experimental.pallas import tpu as pltpu

IN_F = 42      # 6*7 connect-4 board
HID = 128
OUT_F = 7
K_PAD = 128    # padded feature dim (lane multiple)
N_PAD = 128    # padded output dim (lane-dense stores)


def _round_up(n, m):
    return ((n + m - 1) // m) * m


def qnetwork_kernel(x_ref, w1_ref, b1_ref, w2_ref, b2_ref, o_ref):
    # x_ref:  (TB, 128)  f32   (features zero-padded 42 -> 128)
    # w1_ref: (128, 128) bf16  (rows 42.. are zero)
    # b1_ref: (1, 128)   f32
    # w2_ref: (128, 128) bf16  (cols 7.. are zero)
    # b2_ref: (1, 128)   f32   (cols 7.. are zero)
    # o_ref:  (TB, 128)  f32   (lane-dense; wrapper slices [:, :7])
    x = x_ref[...]
    h = jnp.dot(x.astype(jnp.bfloat16), w1_ref[...],
                preferred_element_type=jnp.float32)          # (TB, 128) f32 acc
    h = jnp.maximum(h + b1_ref[...], 0.0)                    # bias + ReLU in f32
    y = jnp.dot(h.astype(jnp.bfloat16), w2_ref[...],
                preferred_element_type=jnp.float32)          # (TB, 128) f32 acc
    o_ref[...] = y + b2_ref[...]


def qnetwork_forward(x, w1, b1, w2, b2, *, max_tb=512):
    """x: (B, 42) f32; w1: (42,128); b1: (1,128); w2: (128,7); b2: (1,7)."""
    B = x.shape[0]

    # Batch tile: multiple of 8, capped at max_tb (sized well inside v7x's
    # 32 MiB scoped VMEM default even with double buffering).
    TB = min(max_tb, _round_up(B, 8))
    B_pad = _round_up(B, TB)

    # Zero-pad to tile-aligned, lane-dense operands (done once per call in XLA).
    x_p = jnp.zeros((B_pad, K_PAD), jnp.float32).at[:B, :IN_F].set(x)
    w1_p = jnp.zeros((K_PAD, HID), jnp.bfloat16).at[:IN_F, :].set(
        w1.astype(jnp.bfloat16))
    b1_p = b1.reshape(1, HID).astype(jnp.float32)
    w2_p = jnp.zeros((HID, N_PAD), jnp.bfloat16).at[:, :OUT_F].set(
        w2.astype(jnp.bfloat16))
    b2_p = jnp.zeros((1, N_PAD), jnp.float32).at[:, :OUT_F].set(
        b2.reshape(1, OUT_F).astype(jnp.float32))

    grid = (B_pad // TB,)
    y = pl.pallas_call(
        qnetwork_kernel,
        out_shape=jax.ShapeDtypeStruct((B_pad, N_PAD), jnp.float32),
        grid=grid,
        in_specs=[
            pl.BlockSpec((TB, K_PAD), lambda i: (i, 0)),   # x: tiled over batch
            pl.BlockSpec((K_PAD, HID), lambda i: (0, 0)),  # w1: resident
            pl.BlockSpec((1, HID), lambda i: (0, 0)),      # b1: resident
            pl.BlockSpec((HID, N_PAD), lambda i: (0, 0)),  # w2: resident
            pl.BlockSpec((1, N_PAD), lambda i: (0, 0)),    # b2: resident
        ],
        out_specs=pl.BlockSpec((TB, N_PAD), lambda i: (i, 0)),
        compiler_params=pltpu.CompilerParams(
            dimension_semantics=("parallel",),
        ),
    )(x_p, w1_p, b1_p, w2_p, b2_p)

    # Slice away batch padding and the zero-padded action columns (so a
    # downstream argmax over actions can never pick a padded column).
    return y[:B, :OUT_F]


def init_params(key):
    # Deterministic init mimicking PyTorch nn.Linear default:
    # U(-1/sqrt(fan_in), 1/sqrt(fan_in)) for both weight and bias.
    k1, k2, k3, k4 = jax.random.split(key, 4)
    bound1 = 1.0 / jnp.sqrt(jnp.float32(IN_F))
    bound2 = 1.0 / jnp.sqrt(jnp.float32(HID))
    w1 = jax.random.uniform(k1, (IN_F, HID), jnp.float32, -bound1, bound1)
    b1 = jax.random.uniform(k2, (1, HID), jnp.float32, -bound1, bound1)
    w2 = jax.random.uniform(k3, (HID, OUT_F), jnp.float32, -bound2, bound2)
    b2 = jax.random.uniform(k4, (1, OUT_F), jnp.float32, -bound2, bound2)
    return w1, b1, w2, b2


if __name__ == "__main__":
    key = jax.random.PRNGKey(0)
    kx, kp = jax.random.split(key)

    batch = 8
    x = jax.random.normal(kx, (batch, IN_F), dtype=jnp.float32)
    w1, b1, w2, b2 = init_params(kp)

    out = qnetwork_forward(x, w1, b1, w2, b2)
    out = jax.block_until_ready(out)
    assert out.shape == (batch, OUT_F)

    # Reference with the same bf16-operand / f32-accumulate precision as the kernel.
    xb, w1b, w2b = (x.astype(jnp.bfloat16), w1.astype(jnp.bfloat16),
                    w2.astype(jnp.bfloat16))
    h_ref = jnp.maximum(
        jnp.dot(xb, w1b, preferred_element_type=jnp.float32) + b1, 0.0)
    ref = jnp.dot(h_ref.astype(jnp.bfloat16), w2b,
                  preferred_element_type=jnp.float32) + b2
    assert jnp.allclose(out, ref, atol=1e-3, rtol=1e-3)

    # Coarse check against the full-f32 math of the original PyTorch module.
    ref_f32 = jnp.maximum(x @ w1 + b1, 0.0) @ w2 + b2
    assert jnp.allclose(out, ref_f32, atol=0.1, rtol=0.1)

    print("KERNEL_OK")
</pallas_src>

<mosaic_0001>
module attributes {stable_mosaic.version = 11 : i64} {
  func.func @qnetwork_kernel(%arg0: i32, %arg1: memref<8x128xf32, #tpu.memory_space<vmem>>, %arg2: memref<128x128xbf16, #tpu.memory_space<vmem>>, %arg3: memref<1x128xf32, #tpu.memory_space<vmem>>, %arg4: memref<128x128xbf16, #tpu.memory_space<vmem>>, %arg5: memref<1x128xf32, #tpu.memory_space<vmem>>, %arg6: memref<8x128xf32, #tpu.memory_space<vmem>>) attributes {dimension_semantics = [#tpu.dimension_semantics<parallel>], iteration_bounds = array<i64: 1>, scalar_prefetch = 0 : i64, scratch_operands = 0 : i64, tpu.core_type = #tpu.core_type<tc>, window_params = [{transform_indices = @transform_0, window_bounds = array<i64: 8, 128>}, {pipeline_mode = #tpu.pipeline_mode<synchronous>, transform_indices = @transform_1, window_bounds = array<i64: 128, 128>}, {pipeline_mode = #tpu.pipeline_mode<synchronous>, transform_indices = @transform_2, window_bounds = array<i64: 1, 128>}, {pipeline_mode = #tpu.pipeline_mode<synchronous>, transform_indices = @transform_3, window_bounds = array<i64: 128, 128>}, {pipeline_mode = #tpu.pipeline_mode<synchronous>, transform_indices = @transform_4, window_bounds = array<i64: 1, 128>}, {transform_indices = @transform_5, window_bounds = array<i64: 8, 128>}]} {
    %c0 = arith.constant 0 : index
    %c0_0 = arith.constant 0 : index
    %0 = vector.load %arg1[%c0, %c0_0] : memref<8x128xf32, #tpu.memory_space<vmem>>, vector<8x128xf32>
    %1 = arith.truncf %0 : vector<8x128xf32> to vector<8x128xbf16>
    %c0_1 = arith.constant 0 : index
    %c0_2 = arith.constant 0 : index
    %2 = vector.load %arg2[%c0_1, %c0_2] : memref<128x128xbf16, #tpu.memory_space<vmem>>, vector<128x128xbf16>
    %cst = arith.constant dense<0.000000e+00> : vector<8x128xf32>
    %3 = tpu.matmul %1, %2, %cst {dimension_numbers = #tpu.dot_dimension_numbers<[1], [0], [0], [1], [0, 0, 1, 1], [], []>} : vector<8x128xbf16>, vector<128x128xbf16>, vector<8x128xf32> -> vector<8x128xf32>
    %c0_3 = arith.constant 0 : index
    %c0_4 = arith.constant 0 : index
    %4 = vector.load %arg3[%c0_3, %c0_4] : memref<1x128xf32, #tpu.memory_space<vmem>>, vector<1x128xf32>
    %5 = vector.broadcast %4 : vector<1x128xf32> to vector<8x128xf32>
    %6 = arith.addf %3, %5 : vector<8x128xf32>
    %cst_5 = arith.constant 0.000000e+00 : f32
    %7 = vector.broadcast %cst_5 : f32 to vector<8x128xf32>
    %8 = arith.maximumf %6, %7 : vector<8x128xf32>
    %9 = arith.truncf %8 : vector<8x128xf32> to vector<8x128xbf16>
    %c0_6 = arith.constant 0 : index
    %c0_7 = arith.constant 0 : index
    %10 = vector.load %arg4[%c0_6, %c0_7] : memref<128x128xbf16, #tpu.memory_space<vmem>>, vector<128x128xbf16>
    %cst_8 = arith.constant dense<0.000000e+00> : vector<8x128xf32>
    %11 = tpu.matmul %9, %10, %cst_8 {dimension_numbers = #tpu.dot_dimension_numbers<[1], [0], [0], [1], [0, 0, 1, 1], [], []>} : vector<8x128xbf16>, vector<128x128xbf16>, vector<8x128xf32> -> vector<8x128xf32>
    %c0_9 = arith.constant 0 : index
    %c0_10 = arith.constant 0 : index
    %12 = vector.load %arg5[%c0_9, %c0_10] : memref<1x128xf32, #tpu.memory_space<vmem>>, vector<1x128xf32>
    %13 = vector.broadcast %12 : vector<1x128xf32> to vector<8x128xf32>
    %14 = arith.addf %11, %13 : vector<8x128xf32>
    %c0_11 = arith.constant 0 : index
    %c0_12 = arith.constant 0 : index
    %15 = vector.load %arg6[%c0_11, %c0_12] : memref<8x128xf32, #tpu.memory_space<vmem>>, vector<8x128xf32>
    tpu.vector_store %arg6[%c0_11, %c0_12], %14 {strides = array<i32>} : memref<8x128xf32, #tpu.memory_space<vmem>>, vector<8x128xf32>,
    return
  }
  func.func @transform_0(%arg0: i32) -> (i32, i32) {
    %c0_i32 = arith.constant 0 : i32
    %c0_i32_0 = arith.constant 0 : i32
    return %arg0, %c0_i32 : i32, i32
  }
  func.func @transform_1(%arg0: i32) -> (i32, i32) {
    %c0_i32 = arith.constant 0 : i32
    %c0_i32_0 = arith.constant 0 : i32
    %c0_i32_1 = arith.constant 0 : i32
    return %c0_i32, %c0_i32_0 : i32, i32
  }
  func.func @transform_2(%arg0: i32) -> (i32, i32) {
    %c0_i32 = arith.constant 0 : i32
    %c0_i32_0 = arith.constant 0 : i32
    %c0_i32_1 = arith.constant 0 : i32
    return %c0_i32, %c0_i32_0 : i32, i32
  }
  func.func @transform_3(%arg0: i32) -> (i32, i32) {
    %c0_i32 = arith.constant 0 : i32
    %c0_i32_0 = arith.constant 0 : i32
    %c0_i32_1 = arith.constant 0 : i32
    return %c0_i32, %c0_i32_0 : i32, i32
  }
  func.func @transform_4(%arg0: i32) -> (i32, i32) {
    %c0_i32 = arith.constant 0 : i32
    %c0_i32_0 = arith.constant 0 : i32
    %c0_i32_1 = arith.constant 0 : i32
    return %c0_i32, %c0_i32_0 : i32, i32
  }
  func.func @transform_5(%arg0: i32) -> (i32, i32) {
    %c0_i32 = arith.constant 0 : i32
    %c0_i32_0 = arith.constant 0 : i32
    return %arg0, %c0_i32 : i32, i32
  }
}

</mosaic_0001>

<llo_original>
// kernel: tpu_custom_call.1
$region0: #{tpu_custom_call.1}
  #allocation0 [shape = 'u32[]', space=smem, size = 0x4, offset = 0x4, fixed_abs, tag = 'smem constant byte address 0x4 - core index']
  #allocation1 [shape = 'u32[72,128]{1,0:T(1,128)}', space=vmem, size = 0x9000, scoped, tag = 'internal scratch']
  %s0 = inlined_call_operand.hbm [shape: f32[8,128], index: 0, kind: input, shape index: {}]
  %s1 = inlined_call_operand.hbm [shape: bf16[128,128], index: 1, kind: input, shape index: {}]
  %s2 = inlined_call_operand.vmem [shape: f32[1,128], index: 2, kind: input, shape index: {}]
  %s3 = inlined_call_operand.hbm [shape: bf16[128,128], index: 3, kind: input, shape index: {}]
  %s4 = inlined_call_operand.vmem [shape: f32[1,128], index: 4, kind: input, shape index: {}]
  %s5 = inlined_call_operand.hbm [shape: f32[8,128], index: 5, kind: output, shape index: {}]
  %s6 = sld [smem:[#allocation0]]
  $region42: #{tpu_custom_call.1} parent=0
    _
  %s8 = ssub.s32 1, %s6
  %s9 = scalar_select 0, %s8, %s6
  $region1: #{tpu_custom_call.1} parent=0
    #allocation2 [shape = 'u8[4096]{0}', space=vmem, size = 0x1000, scoped, tag = 'input window, operand 0, single buffered']
    #allocation3 [shape = 's32[1]{0}', space=sflag, size = 0x4, scoped, tag = 'scoped memory for tpu_custom_call.1']
    #allocation4 [shape = 's32[1]{0}', space=sflag, size = 0x4, scoped, tag = 'scoped memory for tpu_custom_call.1']
    #allocation5 [shape = 'u8[32768]{0}', space=vmem, size = 0x8000, scoped, tag = 'input window, operand 1, single buffered']
    #allocation6 [shape = 's32[1]{0}', space=sflag, size = 0x4, scoped, tag = 'scoped memory for tpu_custom_call.1']
    #allocation7 [shape = 'u8[32768]{0}', space=vmem, size = 0x8000, scoped, tag = 'input window, operand 3, single buffered']
    #allocation8 [shape = 'u8[4096]{0}', space=vmem, size = 0x1000, scoped, tag = 'output window, operand 0, single buffered']
    %10 = vsyncpa [#allocation3], 0
    %11 = vsyncpa [#allocation6], 0
    %12 = vsyncpa [#allocation4], 0
    // Predicated region
    $region2: #{tpu_custom_call.1} parent=1 // pred_check
      _
    $region3: #{tpu_custom_call.1} parent=1 // pred_check_branch
      %14 = sbr.rel (0) target = $region5
    $region4: #{tpu_custom_call.1} parent=1 // pred_region
      %16 = vsyncadd [#allocation3], 0
      %s18 = sshll.u32 %s0, 4
      %s19 = int_to_ptr.hbm [resolvable:$true] %s18
      %s20 = sshll.u32 [#allocation2], 4
      %s21 = int_to_ptr.vmem [resolvable:$true] %s20
      %23 = dma.hbm_to_vmem [thread:$0]  %s19, 128, %s21, [#allocation3]
    $region5: #{tpu_custom_call.1} parent=1 // pred_fallthru
      _
    // Predicated region
    $region6: #{tpu_custom_call.1} parent=1 // pred_check
      _
    $region7: #{tpu_custom_call.1} parent=1 // pred_check_branch
      %25 = sbr.rel (0) target = $region9
    $region8: #{tpu_custom_call.1} parent=1 // pred_region
      %27 = vsyncadd [#allocation6], 0
      %s28 = sshll.u32 %s1, 4
      %s29 = int_to_ptr.hbm [resolvable:$true] %s28
      %s30 = sshll.u32 [#allocation5], 4
      %s31 = int_to_ptr.vmem [resolvable:$true] %s30
      %36 = dma.hbm_to_vmem [thread:$0]  %s29, 1024, %s31, [#allocation6], 64, 64, 4
    $region9: #{tpu_custom_call.1} parent=1 // pred_fallthru
      _
    // Predicated region
    $region10: #{tpu_custom_call.1} parent=1 // pred_check
      _
    $region11: #{tpu_custom_call.1} parent=1 // pred_check_branch
      %38 = sbr.rel (0) target = $region13
    $region12: #{tpu_custom_call.1} parent=1 // pred_region
      _
    $region13: #{tpu_custom_call.1} parent=1 // pred_fallthru
      _
    // Predicated region
    $region14: #{tpu_custom_call.1} parent=1 // pred_check
      _
    $region15: #{tpu_custom_call.1} parent=1 // pred_check_branch
      %40 = sbr.rel (0) target = $region17
    $region16: #{tpu_custom_call.1} parent=1 // pred_region
      %42 = vsyncadd [#allocation6], 0
      %s43 = sshll.u32 %s3, 4
      %s44 = int_to_ptr.hbm [resolvable:$true] %s43
      %s45 = sshll.u32 [#allocation7], 4
      %s46 = int_to_ptr.vmem [resolvable:$true] %s45
      %51 = dma.hbm_to_vmem [thread:$0]  %s44, 1024, %s46, [#allocation6], 64, 64, 4
    $region17: #{tpu_custom_call.1} parent=1 // pred_fallthru
      _
    // Predicated region
    $region18: #{tpu_custom_call.1} parent=1 // pred_check
      _
    $region19: #{tpu_custom_call.1} parent=1 // pred_check_branch
      %53 = sbr.rel (0) target = $region21
    $region20: #{tpu_custom_call.1} parent=1 // pred_region
      _
    $region21: #{tpu_custom_call.1} parent=1 // pred_fallthru
      _
    // Predicated region
    $region22: #{tpu_custom_call.1} parent=1 // pred_check
      _
    $region23: #{tpu_custom_call.1} parent=1 // pred_check_branch
      %55 = sbr.rel (0) target = $region25
    $region24: #{tpu_custom_call.1} parent=1 // pred_region
      %57 = dma.done [#allocation3], 128
    $region25: #{tpu_custom_call.1} parent=1 // pred_fallthru
      _
    // Predicated region
    $region26: #{tpu_custom_call.1} parent=1 // pred_check
      _
    $region27: #{tpu_custom_call.1} parent=1 // pred_check_branch
      %59 = sbr.rel (0) target = $region29
    $region28: #{tpu_custom_call.1} parent=1 // pred_region
      %61 = dma.done [#allocation6], 1024
    $region29: #{tpu_custom_call.1} parent=1 // pred_fallthru
      _
    // Predicated region
    $region30: #{tpu_custom_call.1} parent=1 // pred_check
      _
    $region31: #{tpu_custom_call.1} parent=1 // pred_check_branch
      %63 = sbr.rel (0) target = $region33
    $region32: #{tpu_custom_call.1} parent=1 // pred_region
      %65 = dma.done [#allocation6], 1024
    $region33: #{tpu_custom_call.1} parent=1 // pred_fallthru
      _
    %v66 = vld [vmem:[#allocation2] sm:$0xff]
    %v67 = vpack.c.bf16 %v66, %v66
    %v68 = vld [vmem:[#allocation5] sm:$0xf]
    %v69 = vld [vmem:[#allocation5 + $0x4] sm:$0xf]
    %v70 = vld [vmem:[#allocation5 + $0x8] sm:$0xf]
    %v71 = vld [vmem:[#allocation5 + $0xc] sm:$0xf]
    %v72 = vld [vmem:[#allocation5 + $0x10] sm:$0xf]
    %v73 = vld [vmem:[#allocation5 + $0x14] sm:$0xf]
    %v74 = vld [vmem:[#allocation5 + $0x18] sm:$0xf]
    %v75 = vld [vmem:[#allocation5 + $0x1c] sm:$0xf]
    %v76 = vld [vmem:[#allocation5 + $0x20] sm:$0xf]
    %v77 = vld [vmem:[#allocation5 + $0x24] sm:$0xf]
    %v78 = vld [vmem:[#allocation5 + $0x28] sm:$0xf]
    %v79 = vld [vmem:[#allocation5 + $0x2c] sm:$0xf]
    %v80 = vld [vmem:[#allocation5 + $0x30] sm:$0xf]
    %v81 = vld [vmem:[#allocation5 + $0x34] sm:$0xf]
    %v82 = vld [vmem:[#allocation5 + $0x38] sm:$0xf]
    %v83 = vld [vmem:[#allocation5 + $0x3c] sm:$0xf]
    %v84 = vld [vmem:[%s2] sm:$0x1]
    %v86 = vperm.slane %v84, 0
    %v104 = vunpack.c.l.b16 %v68
    %v105 = vunpack.c.l.b16 %v69
    %v106 = vunpack.c.l.b16 %v70
    %v107 = vunpack.c.l.b16 %v71
    %v108 = vunpack.c.l.b16 %v72
    %v109 = vunpack.c.l.b16 %v73
    %v110 = vunpack.c.l.b16 %v74
    %v111 = vunpack.c.l.b16 %v75
    %v112 = vunpack.c.l.b16 %v76
    %v113 = vunpack.c.l.b16 %v77
    %v114 = vunpack.c.l.b16 %v78
    %v115 = vunpack.c.l.b16 %v79
    %v116 = vunpack.c.l.b16 %v80
    %v117 = vunpack.c.l.b16 %v81
    %v118 = vunpack.c.l.b16 %v82
    %v119 = vunpack.c.l.b16 %v83
    %v120 = vpack.c.b16 %v105, %v104
    %v121 = vpack.c.b16 %v107, %v106
    %v122 = vpack.c.b16 %v109, %v108
    %v123 = vpack.c.b16 %v111, %v110
    %v124 = vpack.c.b16 %v113, %v112
    %v125 = vpack.c.b16 %v115, %v114
    %v126 = vpack.c.b16 %v117, %v116
    %v127 = vpack.c.b16 %v119, %v118
    %136 = vmatpush.bf16.msra.mxu0 %v127
    %137 = vmatpush.bf16.msra.mxu0 %v126
    %138 = vmatpush.bf16.msra.mxu0 %v125
    %139 = vmatpush.bf16.msra.mxu0 %v124
    %140 = vmatpush.bf16.msra.mxu0 %v123
    %141 = vmatpush.bf16.msra.mxu0 %v122
    %142 = vmatpush.bf16.msra.mxu0 %v121
    %143 = vmatpush.bf16.msra.mxu0 %v120
    %144 = vmatmul.bf16.gmra.mxu0 %v67
    %v145 = vpop.f32.mrf.mxu0
    %v146 = vadd.f32 %v86, %v145
    %v147 = vpop.f32.mrf.mxu0
    %148 = vdwg.mxu0
    %v149 = vmax.f32 %v146, 0.0
    %v150 = vpack.c.bf16 %v149, %v149
    %v151 = vld [vmem:[#allocation7] sm:$0xf]
    %v152 = vld [vmem:[#allocation7 + $0x4] sm:$0xf]
    %v153 = vld [vmem:[#allocation7 + $0x8] sm:$0xf]
    %v154 = vld [vmem:[#allocation7 + $0xc] sm:$0xf]
    %v155 = vld [vmem:[#allocation7 + $0x10] sm:$0xf]
    %v156 = vld [vmem:[#allocation7 + $0x14] sm:$0xf]
    %v157 = vld [vmem:[#allocation7 + $0x18] sm:$0xf]
    %v158 = vld [vmem:[#allocation7 + $0x1c] sm:$0xf]
    %v159 = vld [vmem:[#allocation7 + $0x20] sm:$0xf]
    %v160 = vld [vmem:[#allocation7 + $0x24] sm:$0xf]
    %v161 = vld [vmem:[#allocation7 + $0x28] sm:$0xf]
    %v162 = vld [vmem:[#allocation7 + $0x2c] sm:$0xf]
    %v163 = vld [vmem:[#allocation7 + $0x30] sm:$0xf]
    %v164 = vld [vmem:[#allocation7 + $0x34] sm:$0xf]
    %v165 = vld [vmem:[#allocation7 + $0x38] sm:$0xf]
    %v166 = vld [vmem:[#allocation7 + $0x3c] sm:$0xf]
    %v167 = vld [vmem:[%s4] sm:$0x1]
    %v169 = vperm.slane %v167, 0
    %v187 = vunpack.c.l.b16 %v151
    %v188 = vunpack.c.l.b16 %v152
    %v189 = vunpack.c.l.b16 %v153
    %v190 = vunpack.c.l.b16 %v154
    %v191 = vunpack.c.l.b16 %v155
    %v192 = vunpack.c.l.b16 %v156
    %v193 = vunpack.c.l.b16 %v157
    %v194 = vunpack.c.l.b16 %v158
    %v195 = vunpack.c.l.b16 %v159
    %v196 = vunpack.c.l.b16 %v160
    %v197 = vunpack.c.l.b16 %v161
    %v198 = vunpack.c.l.b16 %v162
    %v199 = vunpack.c.l.b16 %v163
    %v200 = vunpack.c.l.b16 %v164
    %v201 = vunpack.c.l.b16 %v165
    %v202 = vunpack.c.l.b16 %v166
    %v203 = vpack.c.b16 %v188, %v187
    %v204 = vpack.c.b16 %v190, %v189
    %v205 = vpack.c.b16 %v192, %v191
    %v206 = vpack.c.b16 %v194, %v193
    %v207 = vpack.c.b16 %v196, %v195
    %v208 = vpack.c.b16 %v198, %v197
    %v209 = vpack.c.b16 %v200, %v199
    %v210 = vpack.c.b16 %v202, %v201
    %219 = vmatpush.bf16.msra.mxu0 %v210
    %220 = vmatpush.bf16.msra.mxu0 %v209
    %221 = vmatpush.bf16.msra.mxu0 %v208
    %222 = vmatpush.bf16.msra.mxu0 %v207
    %223 = vmatpush.bf16.msra.mxu0 %v206
    %224 = vmatpush.bf16.msra.mxu0 %v205
    %225 = vmatpush.bf16.msra.mxu0 %v204
    %226 = vmatpush.bf16.msra.mxu0 %v203
    %227 = vmatmul.bf16.gmra.mxu0 %v150
    %v228 = vpop.f32.mrf.mxu0
    %v229 = vadd.f32 %v169, %v228
    %v230 = vpop.f32.mrf.mxu0
    %231 = vdwg.mxu0
    %232 = vst [vmem:[#allocation8] sm:$0xff] %v229
    // Predicated region
    $region34: #{tpu_custom_call.1} parent=1 // pred_check
      _
    $region35: #{tpu_custom_call.1} parent=1 // pred_check_branch
      %234 = sbr.rel (0) target = $region37
    $region36: #{tpu_custom_call.1} parent=1 // pred_region
      %236 = vsyncadd [#allocation4], 0
      %s238 = sshll.u32 [#allocation8], 4
      %s239 = int_to_ptr.vmem [resolvable:$true] %s238
      %s240 = sshll.u32 %s5, 4
      %s241 = int_to_ptr.hbm [resolvable:$true] %s240
      %243 = dma.vmem_to_hbm [thread:$0]  %s239, 128, %s241, [#allocation4]
    $region37: #{tpu_custom_call.1} parent=1 // pred_fallthru
      _
    // Predicated region
    $region38: #{tpu_custom_call.1} parent=1 // pred_check
      _
    $region39: #{tpu_custom_call.1} parent=1 // pred_check_branch
      %245 = sbr.rel (0) target = $region41
    $region40: #{tpu_custom_call.1} parent=1 // pred_region
      %247 = dma.done [#allocation4], 128
    $region41: #{tpu_custom_call.1} parent=1 // pred_fallthru
      _
    %248 = vsyncpa [#allocation3], 1
    %249 = vsyncpa [#allocation6], 1
    %250 = vsyncpa [#allocation4], 1

</llo_original>
